<compile_context>
chip_gen: v7x
topology: tpu7x:2x2x1
jax: 0.10.0
libtpu: 0.0.40
codegen_flags: <defaults>
</compile_context>

<pallas_src>
import functools
import math

import jax
import jax.numpy as jnp
from jax import lax
from jax.experimental import pallas as pl
from jax.experimental.pallas import tpu as pltpu


def mscam_kernel(x_ref, w_ref, masks_ref, pool_ref, poolt_ref, fc1_ref, fc2_ref,
                 out_ref, *, inv_L):
    # x_ref    : (C, Nt)      Nt = Bt*L_pad lanes (batch folded into lanes)
    # w_ref    : (C, 5C+1)    stacked fused conv taps + bias column
    # masks_ref: (5, Nt)      per-tap validity masks (precomputed, resident)
    # pool_ref : (Bt, Nt)     0/1 segment indicator (attention broadcast)
    # poolt_ref: (Nt, Bt)     0/1 indicator of REAL (non-padded) columns (pooling)
    # out_ref  : (C, Nt)
    C, Nt = out_ref.shape
    x = x_ref[...]

    # im2col via lane rotations (XLU slot) + precomputed masks (one VPU mul/tap).
    parts = []
    for k in range(5):                                   # static unroll, 5 taps
        d = k - 2                                        # tap k reads x[:, l + d]
        shifted = x if d == 0 else pltpu.roll(x, shift=(-d) % Nt, axis=1)
        if d != 0:
            shifted = shifted * masks_ref[pl.ds(k, 1), :]   # zero cross-segment wrap
        parts.append(shifted)
    parts.append(jnp.ones((1, Nt), dtype=x.dtype))       # ones row -> bias column
    x_stack = jnp.concatenate(parts, axis=0)             # (5C+1, Nt)

    # fused k=5 conv (+bias) == ONE MXU pass with K = 5C+1, f32 accumulation
    msf = jnp.dot(w_ref[...], x_stack, preferred_element_type=jnp.float32)   # (C, Nt)

    # adaptive_avg_pool1d(., 1) for all Bt segments at once (MXU, real cols only)
    sums = jnp.dot(msf.astype(poolt_ref.dtype), poolt_ref[...],
                   preferred_element_type=jnp.float32)                       # (C, Bt)
    avg = sums * inv_L

    # bottleneck batched to N=Bt: sigmoid(fc2(relu(fc1(avg))))
    h = jnp.maximum(
        jnp.dot(fc1_ref[...], avg.astype(fc1_ref.dtype),
                preferred_element_type=jnp.float32), 0.0)                    # (H, Bt)
    logits = jnp.dot(fc2_ref[...], h.astype(fc2_ref.dtype),
                     preferred_element_type=jnp.float32)                     # (C, Bt)
    attn = jax.nn.sigmoid(logits)                                            # f32 (EUP)

    # broadcast attention back over each segment (MXU) and apply (f32 VPU tail)
    attn_full = jnp.dot(attn.astype(pool_ref.dtype), pool_ref[...],
                        preferred_element_type=jnp.float32)                  # (C, Nt)
    out_ref[...] = (msf * attn_full).astype(out_ref.dtype)


def _round_up(v, m):
    return ((v + m - 1) // m) * m


def _tile_bytes(rows, cols, itemsize):
    return _round_up(max(rows, 1), 8) * _round_up(max(cols, 1), 128) * itemsize


def _vmem_estimate(C, H, Bt, L_pad, cb, ob):
    """Per-grid-step VMEM working set, including in-kernel intermediates."""
    Nt = Bt * L_pad
    est = 0
    est += 2 * _tile_bytes(C, Nt, cb)              # x input (double-buffered)
    est += 2 * _tile_bytes(C, Nt, ob)              # output  (double-buffered)
    est += 2 * _tile_bytes(C, 5 * C + 1, cb)       # fused conv weights (+bias col)
    est += 2 * _tile_bytes(5, Nt, cb)              # tap masks
    est += 2 * _tile_bytes(Bt, Nt, cb)             # pool indicator
    est += 2 * _tile_bytes(Nt, Bt, cb)             # pool_t indicator (lane-padded)
    est += 2 * (_tile_bytes(H, C, cb) + _tile_bytes(C, H, cb))
    est += _tile_bytes(5 * C + 1, Nt, cb)          # x_stack (in-kernel)
    est += 2 * _tile_bytes(C, Nt, 4)               # msf + attn_full (f32)
    est += _tile_bytes(C, Nt, max(cb, ob))         # store staging / product
    return est


def _choose_tiling(B, C, H, L, cb, ob, budget):
    """Pick (Bt, L_pad): Bt divides B, Bt*L_pad is a multiple of 128 (lane-dense
    unmasked stores), and the per-step working set fits the VMEM budget."""
    cands = []
    for bt in range(1, B + 1):
        if B % bt:
            continue
        lpad = _round_up(L, 128 // math.gcd(bt, 128))
        cands.append((bt, lpad, _vmem_estimate(C, H, bt, lpad, cb, ob)))
    feas = [(bt, lp) for bt, lp, sz in cands if sz <= budget]
    if not feas:
        bt, lp, _ = min(cands, key=lambda t: t[2])     # best-effort fallback
        return bt, lp

    # HBM-bound kernel: minimise total padded traffic first, then prefer >=2
    # grid steps (pipelining / megacore sharding on v7x), then a lane slab
    # near ~1024 lanes (measured HBM-roofline sweet spot).
    def score(t):
        bt, lp = t
        return (B * lp, 0 if B // bt >= 2 else 1, abs(bt * lp - 1024))
    return min(feas, key=score)


def _vmem_limit_bytes():
    try:
        cap = pltpu.get_tpu_info().vmem_capacity_bytes
    except Exception:
        cap = 64 * 1024 * 1024                     # conservative (v7x per-TC VMEM)
    return min(int(cap * 3 // 4), 100 * 1024 * 1024)


def ms_cam_1d(x, w1, b1, w3, b3, w5, b5, fc1_w, fc2_w, *,
              compute_dtype=jnp.bfloat16, out_dtype=None, block_batch=None):
    """MS_CAM_1D forward. x: (B, C, L); conv weights in PyTorch (out, in, k) layout.
    Default path uses bf16 MXU operands (f32 accumulation / f32 tail); pass
    compute_dtype=jnp.float32 for f32-exact results, out_dtype=bf16 to halve
    output write traffic when the consumer tolerates it."""
    B, C, L = x.shape
    H = fc1_w.shape[0]
    out_dtype = x.dtype if out_dtype is None else out_dtype
    cb = jnp.dtype(compute_dtype).itemsize
    ob = jnp.dtype(out_dtype).itemsize

    # --- parameter glue: fuse k=1/3/5 convs into one k=5 conv, fold bias ------
    w_comb = w5.astype(jnp.float32)                                    # (C, C, 5)
    w_comb = w_comb.at[:, :, 1:4].add(w3.astype(jnp.float32))          # center-align k=3
    w_comb = w_comb.at[:, :, 2].add(w1[:, :, 0].astype(jnp.float32))   # center-align k=1
    b_comb = (b1 + b3 + b5).astype(jnp.float32).reshape(C, 1)
    # (C, C, 5) -> (C, 5, C) -> (C, 5C); column index = tap*C + in_channel
    w_stacked = jnp.transpose(w_comb, (0, 2, 1)).reshape(C, 5 * C)
    w_aug = jnp.concatenate([w_stacked, b_comb], axis=1).astype(compute_dtype)  # (C, 5C+1)

    # --- generation-aware tiling / lane padding --------------------------------
    vmem_limit = _vmem_limit_bytes()
    if block_batch is None:
        Bt, L_pad = _choose_tiling(B, C, H, L, cb, ob, int(vmem_limit * 0.8))
    else:
        Bt = block_batch
        assert B % Bt == 0, "block_batch must divide the batch size"
        L_pad = _round_up(L, 128 // math.gcd(Bt, 128))
    Nt = Bt * L_pad
    N_pad = B * L_pad
    grid = (B // Bt,)

    # --- layout plumbing: (B, C, L) -> zero-padded lane-dense (C, B*L_pad) -----
    x_t = jnp.transpose(x, (1, 0, 2))                                  # (C, B, L)
    if L_pad != L:
        x_t = jnp.pad(x_t, ((0, 0), (0, 0), (0, L_pad - L)))
    x_t = x_t.reshape(C, N_pad).astype(compute_dtype)

    # --- per-step constants hoisted out of the kernel (resident inputs) --------
    lane = jnp.arange(Nt, dtype=jnp.int32)
    lpos = lane % L_pad
    seg = lane // L_pad
    taps = jnp.stack([((lpos + (k - 2) >= 0) & (lpos + (k - 2) < L))
                      for k in range(5)], axis=0).astype(compute_dtype)     # (5, Nt)
    pool = (seg[None, :] == jnp.arange(Bt, dtype=jnp.int32)[:, None]
            ).astype(compute_dtype)                                         # (Bt, Nt)
    pool_t = ((seg[:, None] == jnp.arange(Bt, dtype=jnp.int32)[None, :])
              & (lpos < L)[:, None]).astype(compute_dtype)                  # (Nt, Bt)

    isz = lambda a: a.size * a.dtype.itemsize
    cost = pl.CostEstimate(
        flops=int(2 * C * (5 * C + 1) * B * L_pad          # fused conv
                  + 4 * C * B * L_pad * Bt                 # pool + attn broadcast
                  + 4 * H * C * B),                        # bottleneck
        transcendentals=int(C * B),                        # sigmoid
        bytes_accessed=int(isz(x_t) + C * N_pad * ob + isz(w_aug)
                           + isz(taps) + isz(pool) + isz(pool_t)
                           + 2 * H * C * cb),
    )

    out_t = pl.pallas_call(
        functools.partial(mscam_kernel, inv_L=1.0 / L),
        out_shape=jax.ShapeDtypeStruct((C, N_pad), out_dtype),
        grid_spec=pltpu.PrefetchScalarGridSpec(
            num_scalar_prefetch=0,
            grid=grid,
            in_specs=[
                pl.BlockSpec((C, Nt), lambda g: (0, g)),            # x slab (lane-dense)
                pl.BlockSpec((C, 5 * C + 1), lambda g: (0, 0)),     # fused conv + bias
                pl.BlockSpec((5, Nt), lambda g: (0, 0)),            # tap masks
                pl.BlockSpec((Bt, Nt), lambda g: (0, 0)),           # pool
                pl.BlockSpec((Nt, Bt), lambda g: (0, 0)),           # pool_t
                pl.BlockSpec((H, C), lambda g: (0, 0)),             # fc1
                pl.BlockSpec((C, H), lambda g: (0, 0)),             # fc2
            ],
            out_specs=pl.BlockSpec((C, Nt), lambda g: (0, g)),
        ),
        compiler_params=pltpu.CompilerParams(
            dimension_semantics=("parallel",),
            vmem_limit_bytes=vmem_limit),
        cost_estimate=cost,
    )(x_t, w_aug, taps, pool, pool_t,
      fc1_w.astype(compute_dtype), fc2_w.astype(compute_dtype))

    # drop padded columns, back to the (B, C, L) layout of the PyTorch module
    out = out_t.reshape(C, B, L_pad)[:, :, :L]
    return jnp.transpose(out, (1, 0, 2))


def ms_cam_1d_reference(x, w1, b1, w3, b3, w5, b5, fc1_w, fc2_w):
    """Pure-JAX reference matching the PyTorch forward pass."""
    dn = ("NCH", "OIH", "NCH")
    x1 = lax.conv_general_dilated(x, w1, (1,), "SAME", dimension_numbers=dn) + b1[None, :, None]
    x2 = lax.conv_general_dilated(x, w3, (1,), "SAME", dimension_numbers=dn) + b3[None, :, None]
    x3 = lax.conv_general_dilated(x, w5, (1,), "SAME", dimension_numbers=dn) + b5[None, :, None]
    msf = x1 + x2 + x3
    avg = jnp.mean(msf, axis=2)                        # (B, C)
    h = jnp.maximum(avg @ fc1_w.T, 0.0)
    attn = jax.nn.sigmoid(h @ fc2_w.T)                 # (B, C)
    return msf * attn[:, :, None]


if __name__ == "__main__":
    B, C, L, reduction = 2, 32, 16, 16
    H = C // reduction

    key = jax.random.PRNGKey(0)
    ks = jax.random.split(key, 9)
    scale = 0.1
    x = jax.random.normal(ks[0], (B, C, L), jnp.float32)
    w1 = scale * jax.random.normal(ks[1], (C, C, 1), jnp.float32)
    b1 = scale * jax.random.normal(ks[2], (C,), jnp.float32)
    w3 = scale * jax.random.normal(ks[3], (C, C, 3), jnp.float32)
    b3 = scale * jax.random.normal(ks[4], (C,), jnp.float32)
    w5 = scale * jax.random.normal(ks[5], (C, C, 5), jnp.float32)
    b5 = scale * jax.random.normal(ks[6], (C,), jnp.float32)
    fc1_w = scale * jax.random.normal(ks[7], (H, C), jnp.float32)
    fc2_w = scale * jax.random.normal(ks[8], (C, H), jnp.float32)

    ref = ms_cam_1d_reference(x, w1, b1, w3, b3, w5, b5, fc1_w, fc2_w)

    # exactness check: f32 MXU operands
    out_f32 = jax.block_until_ready(
        ms_cam_1d(x, w1, b1, w3, b3, w5, b5, fc1_w, fc2_w,
                  compute_dtype=jnp.float32))
    assert out_f32.shape == (B, C, L)
    assert jnp.allclose(out_f32, ref, atol=1e-4, rtol=1e-4), "f32 mismatch vs reference"

    # default perf path: bf16 MXU operands, f32 accumulation / f32 VPU tail
    out_bf16 = jax.block_until_ready(
        ms_cam_1d(x, w1, b1, w3, b3, w5, b5, fc1_w, fc2_w))
    assert out_bf16.shape == (B, C, L)
    assert jnp.allclose(out_bf16, ref, atol=5e-2, rtol=5e-2), "bf16 mismatch vs reference"

    print("KERNEL_OK")
</pallas_src>

<mosaic_0001>
module attributes {stable_mosaic.version = 11 : i64} {
  func.func @mscam_kernel(%arg0: i32, %arg1: memref<32x128xf32, #tpu.memory_space<vmem>>, %arg2: memref<32x161xf32, #tpu.memory_space<vmem>>, %arg3: memref<5x128xf32, #tpu.memory_space<vmem>>, %arg4: memref<2x128xf32, #tpu.memory_space<vmem>>, %arg5: memref<128x2xf32, #tpu.memory_space<vmem>>, %arg6: memref<2x32xf32, #tpu.memory_space<vmem>>, %arg7: memref<32x2xf32, #tpu.memory_space<vmem>>, %arg8: memref<32x128xf32, #tpu.memory_space<vmem>>) attributes {dimension_semantics = [#tpu.dimension_semantics<parallel>], iteration_bounds = array<i64: 1>, scalar_prefetch = 0 : i64, scratch_operands = 0 : i64, tpu.core_type = #tpu.core_type<tc>, window_params = [{transform_indices = @transform_0, window_bounds = array<i64: 32, 128>}, {pipeline_mode = #tpu.pipeline_mode<synchronous>, transform_indices = @transform_1, window_bounds = array<i64: 32, 161>}, {pipeline_mode = #tpu.pipeline_mode<synchronous>, transform_indices = @transform_2, window_bounds = array<i64: 5, 128>}, {pipeline_mode = #tpu.pipeline_mode<synchronous>, transform_indices = @transform_3, window_bounds = array<i64: 2, 128>}, {pipeline_mode = #tpu.pipeline_mode<synchronous>, transform_indices = @transform_4, window_bounds = array<i64: 128, 2>}, {pipeline_mode = #tpu.pipeline_mode<synchronous>, transform_indices = @transform_5, window_bounds = array<i64: 2, 32>}, {pipeline_mode = #tpu.pipeline_mode<synchronous>, transform_indices = @transform_6, window_bounds = array<i64: 32, 2>}, {transform_indices = @transform_7, window_bounds = array<i64: 32, 128>}]} {
    %c0 = arith.constant 0 : index
    %c0_0 = arith.constant 0 : index
    %0 = vector.load %arg1[%c0, %c0_0] : memref<32x128xf32, #tpu.memory_space<vmem>>, vector<32x128xf32>
    %c2_i32 = arith.constant 2 : i32
    %1 = tpu.dynamic_rotate %0 by %c2_i32 dim 1 : vector<32x128xf32>, i32 -> vector<32x128xf32>
    %c0_1 = arith.constant 0 : index
    %c0_2 = arith.constant 0 : index
    %2 = vector.load %arg3[%c0_1, %c0_2] : memref<5x128xf32, #tpu.memory_space<vmem>>, vector<1x128xf32>
    %3 = vector.broadcast %2 : vector<1x128xf32> to vector<32x128xf32>
    %4 = arith.mulf %1, %3 : vector<32x128xf32>
    %c1_i32 = arith.constant 1 : i32
    %5 = tpu.dynamic_rotate %0 by %c1_i32 dim 1 : vector<32x128xf32>, i32 -> vector<32x128xf32>
    %c1 = arith.constant 1 : index
    %c0_3 = arith.constant 0 : index
    %6 = vector.load %arg3[%c1, %c0_3] : memref<5x128xf32, #tpu.memory_space<vmem>>, vector<1x128xf32>
    %7 = vector.broadcast %6 : vector<1x128xf32> to vector<32x128xf32>
    %8 = arith.mulf %5, %7 : vector<32x128xf32>
    %c127_i32 = arith.constant 127 : i32
    %9 = tpu.dynamic_rotate %0 by %c127_i32 dim 1 : vector<32x128xf32>, i32 -> vector<32x128xf32>
    %c3 = arith.constant 3 : index
    %c0_4 = arith.constant 0 : index
    %10 = vector.load %arg3[%c3, %c0_4] : memref<5x128xf32, #tpu.memory_space<vmem>>, vector<1x128xf32>
    %11 = vector.broadcast %10 : vector<1x128xf32> to vector<32x128xf32>
    %12 = arith.mulf %9, %11 : vector<32x128xf32>
    %c126_i32 = arith.constant 126 : i32
    %13 = tpu.dynamic_rotate %0 by %c126_i32 dim 1 : vector<32x128xf32>, i32 -> vector<32x128xf32>
    %c4 = arith.constant 4 : index
    %c0_5 = arith.constant 0 : index
    %14 = vector.load %arg3[%c4, %c0_5] : memref<5x128xf32, #tpu.memory_space<vmem>>, vector<1x128xf32>
    %15 = vector.broadcast %14 : vector<1x128xf32> to vector<32x128xf32>
    %16 = arith.mulf %13, %15 : vector<32x128xf32>
    %cst = arith.constant 1.000000e+00 : f32
    %17 = vector.broadcast %cst : f32 to vector<1x128xf32>
    %18 = tpu.concatenate %4, %8, %0, %12, %16, %17 in 0 : vector<32x128xf32>, vector<32x128xf32>, vector<32x128xf32>, vector<32x128xf32>, vector<32x128xf32>, vector<1x128xf32> -> vector<161x128xf32>
    %c0_6 = arith.constant 0 : index
    %c0_7 = arith.constant 0 : index
    %19 = vector.load %arg2[%c0_6, %c0_7] : memref<32x161xf32, #tpu.memory_space<vmem>>, vector<32x161xf32>
    %cst_8 = arith.constant dense<0.000000e+00> : vector<32x128xf32>
    %20 = tpu.matmul %19, %18, %cst_8 {dimension_numbers = #tpu.dot_dimension_numbers<[1], [0], [0], [1], [0, 0, 1, 1], [], []>} : vector<32x161xf32>, vector<161x128xf32>, vector<32x128xf32> -> vector<32x128xf32>
    %c0_9 = arith.constant 0 : index
    %c0_10 = arith.constant 0 : index
    %21 = vector.load %arg5[%c0_9, %c0_10] : memref<128x2xf32, #tpu.memory_space<vmem>>, vector<128x2xf32>
    %cst_11 = arith.constant dense<0.000000e+00> : vector<32x2xf32>
    %22 = tpu.matmul %20, %21, %cst_11 {dimension_numbers = #tpu.dot_dimension_numbers<[1], [0], [0], [1], [0, 0, 1, 1], [], []>} : vector<32x128xf32>, vector<128x2xf32>, vector<32x2xf32> -> vector<32x2xf32>
    %cst_12 = arith.constant 6.250000e-02 : f32
    %23 = vector.broadcast %cst_12 : f32 to vector<32x2xf32>
    %24 = arith.mulf %22, %23 : vector<32x2xf32>
    %c0_13 = arith.constant 0 : index
    %c0_14 = arith.constant 0 : index
    %25 = vector.load %arg6[%c0_13, %c0_14] : memref<2x32xf32, #tpu.memory_space<vmem>>, vector<2x32xf32>
    %cst_15 = arith.constant dense<0.000000e+00> : vector<2x2xf32>
    %26 = tpu.matmul %25, %24, %cst_15 {dimension_numbers = #tpu.dot_dimension_numbers<[1], [0], [0], [1], [0, 0, 1, 1], [], []>} : vector<2x32xf32>, vector<32x2xf32>, vector<2x2xf32> -> vector<2x2xf32>
    %cst_16 = arith.constant 0.000000e+00 : f32
    %27 = vector.broadcast %cst_16 : f32 to vector<2x2xf32>
    %28 = arith.maximumf %26, %27 : vector<2x2xf32>
    %c0_17 = arith.constant 0 : index
    %c0_18 = arith.constant 0 : index
    %29 = vector.load %arg7[%c0_17, %c0_18] : memref<32x2xf32, #tpu.memory_space<vmem>>, vector<32x2xf32>
    %cst_19 = arith.constant dense<0.000000e+00> : vector<32x2xf32>
    %30 = tpu.matmul %29, %28, %cst_19 {dimension_numbers = #tpu.dot_dimension_numbers<[1], [0], [0], [1], [0, 0, 1, 1], [], []>} : vector<32x2xf32>, vector<2x2xf32>, vector<32x2xf32> -> vector<32x2xf32>
    %31 = arith.negf %30 : vector<32x2xf32>
    %32 = math.exp %31 : vector<32x2xf32>
    %cst_20 = arith.constant 1.000000e+00 : f32
    %33 = vector.broadcast %cst_20 : f32 to vector<32x2xf32>
    %34 = arith.addf %33, %32 : vector<32x2xf32>
    %35 = arith.divf %33, %34 : vector<32x2xf32>
    %c0_21 = arith.constant 0 : index
    %c0_22 = arith.constant 0 : index
    %36 = vector.load %arg4[%c0_21, %c0_22] : memref<2x128xf32, #tpu.memory_space<vmem>>, vector<2x128xf32>
    %cst_23 = arith.constant dense<0.000000e+00> : vector<32x128xf32>
    %37 = tpu.matmul %35, %36, %cst_23 {dimension_numbers = #tpu.dot_dimension_numbers<[1], [0], [0], [1], [0, 0, 1, 1], [], []>} : vector<32x2xf32>, vector<2x128xf32>, vector<32x128xf32> -> vector<32x128xf32>
    %38 = arith.mulf %20, %37 : vector<32x128xf32>
    %c0_24 = arith.constant 0 : index
    %c0_25 = arith.constant 0 : index
    %39 = vector.load %arg8[%c0_24, %c0_25] : memref<32x128xf32, #tpu.memory_space<vmem>>, vector<32x128xf32>
    tpu.vector_store %arg8[%c0_24, %c0_25], %38 {strides = array<i32>} : memref<32x128xf32, #tpu.memory_space<vmem>>, vector<32x128xf32>,
    return
  }
  func.func @transform_0(%arg0: i32) -> (i32, i32) {
    %c0_i32 = arith.constant 0 : i32
    %c0_i32_0 = arith.constant 0 : i32
    return %c0_i32, %arg0 : i32, i32
  }
  func.func @transform_1(%arg0: i32) -> (i32, i32) {
    %c0_i32 = arith.constant 0 : i32
    %c0_i32_0 = arith.constant 0 : i32
    %c0_i32_1 = arith.constant 0 : i32
    return %c0_i32, %c0_i32_0 : i32, i32
  }
  func.func @transform_2(%arg0: i32) -> (i32, i32) {
    %c0_i32 = arith.constant 0 : i32
    %c0_i32_0 = arith.constant 0 : i32
    %c0_i32_1 = arith.constant 0 : i32
    return %c0_i32, %c0_i32_0 : i32, i32
  }
  func.func @transform_3(%arg0: i32) -> (i32, i32) {
    %c0_i32 = arith.constant 0 : i32
    %c0_i32_0 = arith.constant 0 : i32
    %c0_i32_1 = arith.constant 0 : i32
    return %c0_i32, %c0_i32_0 : i32, i32
  }
  func.func @transform_4(%arg0: i32) -> (i32, i32) {
    %c0_i32 = arith.constant 0 : i32
    %c0_i32_0 = arith.constant 0 : i32
    %c0_i32_1 = arith.constant 0 : i32
    return %c0_i32, %c0_i32_0 : i32, i32
  }
  func.func @transform_5(%arg0: i32) -> (i32, i32) {
    %c0_i32 = arith.constant 0 : i32
    %c0_i32_0 = arith.constant 0 : i32
    %c0_i32_1 = arith.constant 0 : i32
    return %c0_i32, %c0_i32_0 : i32, i32
  }
  func.func @transform_6(%arg0: i32) -> (i32, i32) {
    %c0_i32 = arith.constant 0 : i32
    %c0_i32_0 = arith.constant 0 : i32
    %c0_i32_1 = arith.constant 0 : i32
    return %c0_i32, %c0_i32_0 : i32, i32
  }
  func.func @transform_7(%arg0: i32) -> (i32, i32) {
    %c0_i32 = arith.constant 0 : i32
    %c0_i32_0 = arith.constant 0 : i32
    return %c0_i32, %arg0 : i32, i32
  }
}

</mosaic_0001>

<llo_original>
// kernel: tpu_custom_call.1
$region0: #{tpu_custom_call.1}
  #allocation0 [shape = 'u32[]', space=smem, size = 0x4, offset = 0x4, fixed_abs, tag = 'smem constant byte address 0x4 - core index']
  #allocation1 [shape = 'u32[144,128]{1,0:T(1,128)}', space=vmem, size = 0x12000, scoped, tag = 'internal scratch']
  %s0 = inlined_call_operand.vmem [shape: f32[32,128], index: 0, kind: input, shape index: {}]
  %s1 = inlined_call_operand.vmem [shape: f32[32,161], index: 1, kind: input, shape index: {}]
  %s2 = inlined_call_operand.vmem [shape: f32[5,128], index: 2, kind: input, shape index: {}]
  %s3 = inlined_call_operand.vmem [shape: f32[2,128], index: 3, kind: input, shape index: {}]
  %s4 = inlined_call_operand.vmem [shape: f32[128,2], index: 4, kind: input, shape index: {}]
  %s5 = inlined_call_operand.vmem [shape: f32[2,32], index: 5, kind: input, shape index: {}]
  %s6 = inlined_call_operand.vmem [shape: f32[32,2], index: 6, kind: input, shape index: {}]
  %s7 = inlined_call_operand.hbm [shape: f32[32,128], index: 7, kind: output, shape index: {}]
  %s8 = sld [smem:[#allocation0]]
  $region38: #{tpu_custom_call.1} parent=0
    _
  %s10 = ssub.s32 1, %s8
  %s11 = scalar_select 0, %s10, %s8
  $region1: #{tpu_custom_call.1} parent=0
    #allocation2 [shape = 'u8[16384]{0}', space=vmem, size = 0x4000, scoped, tag = 'output window, operand 0, single buffered']
    #allocation3 [shape = 's32[1]{0}', space=sflag, size = 0x4, scoped, tag = 'scoped memory for tpu_custom_call.1']
    %12 = vsyncpa [#allocation3], 0
    // Predicated region
    $region2: #{tpu_custom_call.1} parent=1 // pred_check
      _
    $region3: #{tpu_custom_call.1} parent=1 // pred_check_branch
      %14 = sbr.rel (0) target = $region5
    $region4: #{tpu_custom_call.1} parent=1 // pred_region
      _
    $region5: #{tpu_custom_call.1} parent=1 // pred_fallthru
      _
    // Predicated region
    $region6: #{tpu_custom_call.1} parent=1 // pred_check
      _
    $region7: #{tpu_custom_call.1} parent=1 // pred_check_branch
      %16 = sbr.rel (0) target = $region9
    $region8: #{tpu_custom_call.1} parent=1 // pred_region
      _
    $region9: #{tpu_custom_call.1} parent=1 // pred_fallthru
      _
    // Predicated region
    $region10: #{tpu_custom_call.1} parent=1 // pred_check
      _
    $region11: #{tpu_custom_call.1} parent=1 // pred_check_branch
      %18 = sbr.rel (0) target = $region13
    $region12: #{tpu_custom_call.1} parent=1 // pred_region
      _
    $region13: #{tpu_custom_call.1} parent=1 // pred_fallthru
      _
    // Predicated region
    $region14: #{tpu_custom_call.1} parent=1 // pred_check
      _
    $region15: #{tpu_custom_call.1} parent=1 // pred_check_branch
      %20 = sbr.rel (0) target = $region17
    $region16: #{tpu_custom_call.1} parent=1 // pred_region
      _
    $region17: #{tpu_custom_call.1} parent=1 // pred_fallthru
      _
    // Predicated region
    $region18: #{tpu_custom_call.1} parent=1 // pred_check
      _
    $region19: #{tpu_custom_call.1} parent=1 // pred_check_branch
      %22 = sbr.rel (0) target = $region21
    $region20: #{tpu_custom_call.1} parent=1 // pred_region
      _
    $region21: #{tpu_custom_call.1} parent=1 // pred_fallthru
      _
    // Predicated region
    $region22: #{tpu_custom_call.1} parent=1 // pred_check
      _
    $region23: #{tpu_custom_call.1} parent=1 // pred_check_branch
      %24 = sbr.rel (0) target = $region25
    $region24: #{tpu_custom_call.1} parent=1 // pred_region
      _
    $region25: #{tpu_custom_call.1} parent=1 // pred_fallthru
      _
    // Predicated region
    $region26: #{tpu_custom_call.1} parent=1 // pred_check
      _
    $region27: #{tpu_custom_call.1} parent=1 // pred_check_branch
      %26 = sbr.rel (0) target = $region29
    $region28: #{tpu_custom_call.1} parent=1 // pred_region
      _
    $region29: #{tpu_custom_call.1} parent=1 // pred_fallthru
      _
    %v27 = vld [vmem:[%s0] sm:$0xff]
    %v28 = vld [vmem:[%s0 + $0x8] sm:$0xff]
    %v29 = vld [vmem:[%s0 + $0x10] sm:$0xff]
    %v30 = vld [vmem:[%s0 + $0x18] sm:$0xff]
    %31 = vrot.lane.b32.xlu0 %v27, 2
    %v32 = vpop.permute.xlu0 %31
    %33 = vrot.lane.b32.xlu0 %v28, 2
    %v34 = vpop.permute.xlu0 %33
    %35 = vrot.lane.b32.xlu0 %v29, 2
    %v36 = vpop.permute.xlu0 %35
    %37 = vrot.lane.b32.xlu0 %v30, 2
    %v38 = vpop.permute.xlu0 %37
    %v39 = vld [vmem:[%s2] sm:$0x1]
    %v40 = vlaneseq
    %v41 = vshrl.u32 %v40, 7
    %v42 = vsub.s32 0, %v41
    %v43 = vrot.slane %v39, %v42
    %v44 = vmul.f32 %v32, %v43
    %v45 = vmul.f32 %v34, %v43
    %v46 = vmul.f32 %v36, %v43
    %v47 = vmul.f32 %v38, %v43
    %48 = vrot.lane.b32.xlu0 %v27, 1
    %v49 = vpop.permute.xlu0 %48
    %50 = vrot.lane.b32.xlu0 %v28, 1
    %v51 = vpop.permute.xlu0 %50
    %52 = vrot.lane.b32.xlu0 %v29, 1
    %v53 = vpop.permute.xlu0 %52
    %54 = vrot.lane.b32.xlu0 %v30, 1
    %v55 = vpop.permute.xlu0 %54
    %v56 = vld [vmem:[%s2 + $0x1] sm:$0x1]
    %v57 = vlaneseq
    %v58 = vshrl.u32 %v57, 7
    %v59 = vsub.s32 0, %v58
    %v60 = vrot.slane %v56, %v59
    %v61 = vmul.f32 %v49, %v60
    %v62 = vmul.f32 %v51, %v60
    %v63 = vmul.f32 %v53, %v60
    %v64 = vmul.f32 %v55, %v60
    %65 = vrot.lane.b32.xlu0 %v27, 127
    %v66 = vpop.permute.xlu0 %65
    %67 = vrot.lane.b32.xlu0 %v28, 127
    %v68 = vpop.permute.xlu0 %67
    %69 = vrot.lane.b32.xlu0 %v29, 127
    %v70 = vpop.permute.xlu0 %69
    %71 = vrot.lane.b32.xlu0 %v30, 127
    %v72 = vpop.permute.xlu0 %71
    %v73 = vld [vmem:[%s2 + $0x3] sm:$0x1]
    %v74 = vlaneseq
    %v75 = vshrl.u32 %v74, 7
    %v76 = vsub.s32 0, %v75
    %v77 = vrot.slane %v73, %v76
    %v78 = vmul.f32 %v66, %v77
    %v79 = vmul.f32 %v68, %v77
    %v80 = vmul.f32 %v70, %v77
    %v81 = vmul.f32 %v72, %v77
    %82 = vrot.lane.b32.xlu0 %v27, 126
    %v83 = vpop.permute.xlu0 %82
    %84 = vrot.lane.b32.xlu0 %v28, 126
    %v85 = vpop.permute.xlu0 %84
    %86 = vrot.lane.b32.xlu0 %v29, 126
    %v87 = vpop.permute.xlu0 %86
    %88 = vrot.lane.b32.xlu0 %v30, 126
    %v89 = vpop.permute.xlu0 %88
    %v90 = vld [vmem:[%s2 + $0x4] sm:$0x1]
    %v91 = vlaneseq
    %v92 = vshrl.u32 %v91, 7
    %v93 = vsub.s32 0, %v92
    %v94 = vrot.slane %v90, %v93
    %v95 = vmul.f32 %v83, %v94
    %v96 = vmul.f32 %v85, %v94
    %v97 = vmul.f32 %v87, %v94
    %v98 = vmul.f32 %v89, %v94
    %v99 = vld [vmem:[%s1] sm:$0xff]
    %v100 = vld [vmem:[%s1 + $0x8] sm:$0xff]
    %v101 = vld [vmem:[%s1 + $0x10] sm:$0xff]
    %v102 = vld [vmem:[%s1 + $0x18] sm:$0xff]
    %v103 = vld [vmem:[%s1 + $0x20] sm:$0xff]
    %v104 = vld [vmem:[%s1 + $0x28] sm:$0xff]
    %v105 = vld [vmem:[%s1 + $0x30] sm:$0xff]
    %v106 = vld [vmem:[%s1 + $0x38] sm:$0xff]
    %vm107 = vcmask 269312
    %v109 = vsel %vm107, %v100, 0
    %v112 = vsel %vm107, %v102, 0
    %v115 = vsel %vm107, %v104, 0
    %v118 = vsel %vm107, %v106, 0
    %vm120 = vcmask 1040384
    %v122 = vsel %vm120, 1.0, 0
    %124 = vmatprep.subr.mxu0 0.0
    %125 = vmatpush1.msra.mxu0 %v44
    %126 = vmatprep.subr.mxu0 0.0
    %127 = vmatpush1.msra.mxu0 %v45
    %128 = vmatprep.subr.mxu0 0.0
    %129 = vmatpush1.msra.mxu0 %v46
    %130 = vmatprep.subr.mxu0 0.0
    %131 = vmatpush1.msra.mxu0 %v47
    %132 = vmatprep.subr.mxu0 0.0
    %133 = vmatpush1.msra.mxu0 %v61
    %134 = vmatprep.subr.mxu0 0.0
    %135 = vmatpush1.msra.mxu0 %v62
    %136 = vmatprep.subr.mxu0 0.0
    %137 = vmatpush1.msra.mxu0 %v63
    %138 = vmatprep.subr.mxu0 0.0
    %139 = vmatpush1.msra.mxu0 %v64
    %140 = vmatprep.subr.mxu0 0.0
    %141 = vmatpush1.msra.mxu0 %v27
    %142 = vmatprep.subr.mxu0 0.0
    %143 = vmatpush1.msra.mxu0 %v28
    %144 = vmatprep.subr.mxu0 0.0
    %145 = vmatpush1.msra.mxu0 %v29
    %146 = vmatprep.subr.mxu0 0.0
    %147 = vmatpush1.msra.mxu0 %v30
    %148 = vmatprep.subr.mxu0 0.0
    %149 = vmatpush1.msra.mxu0 %v78
    %150 = vmatprep.subr.mxu0 0.0
    %151 = vmatpush1.msra.mxu0 %v79
    %152 = vmatprep.subr.mxu0 0.0
    %153 = vmatpush1.msra.mxu0 %v80
    %154 = vmatprep.subr.mxu0 0.0
    %155 = vmatpush1.msra.mxu0 %v81
    %156 = vmatprep.subr.mxu0 0.0
    %157 = vmatpush1.msra.mxu0 %v95
    %158 = vmatprep.subr.mxu0 0.0
    %159 = vmatpush1.msra.mxu0 %v96
    %160 = vmatprep.subr.mxu0 0.0
    %161 = vmatpush1.msra.mxu0 %v97
    %162 = vmatprep.subr.mxu0 0.0
    %163 = vmatpush1.msra.mxu0 %v98
    %164 = vmatprep.subr.mxu0 0.0
    %165 = vmatpush1.msra.mxu0 %v122
    %166 = vmatprep.subr.mxu0 0.0
    %167 = vmatpush1.msra.mxu0 0.0
    %168 = vmatprep.subr.mxu0 0.0
    %169 = vmatpush1.msra.mxu0 0.0
    %170 = vmatprep.subr.mxu0 0.0
    %171 = vmatpush1.msra.mxu0 0.0
    %172 = vmatprep.subr.mxu0 0.0
    %173 = vmatpush1.msra.mxu0 0.0
    %174 = vmatprep.subr.mxu0 0.0
    %175 = vmatpush1.msra.mxu0 0.0
    %176 = vmatprep.subr.mxu0 0.0
    %177 = vmatpush1.msra.mxu0 0.0
    %178 = vmatprep.subr.mxu0 0.0
    %179 = vmatpush1.msra.mxu0 0.0
    %180 = vmatprep.subr.mxu0 0.0
    %181 = vmatpush1.msra.mxu0 0.0
    %182 = vmatprep.subr.mxu0 0.0
    %183 = vmatpush1.msra.mxu0 0.0
    %184 = vmatprep.subr.mxu0 0.0
    %185 = vmatpush1.msra.mxu0 0.0
    %186 = vmatprep.subr.mxu0 0.0
    %187 = vmatpush1.msra.mxu0 0.0
    %188 = vmatprep.mubr.f32.mxu0 %v109
    %189 = vmatmul.mubr.f32.gmra.mrb[0].mxu0 %v99
    %v190 = vpop.f32.mrb[0].mxu0
    %v191 = vadd.f32 0.0, %v190
    %v192 = vpop.f32.mrb[0].mxu0
    %193 = vmatprep.mubr.f32.mxu0 %v112
    %194 = vmatmul.mubr.f32.gmra.mrb[0].mxu0 %v101
    %v195 = vpop.f32.mrb[0].mxu0
    %v196 = vadd.f32 0.0, %v195
    %v197 = vpop.f32.mrb[0].mxu0
    %198 = vmatprep.mubr.f32.mxu0 %v115
    %199 = vmatmul.mubr.f32.gmra.mrb[0].mxu0 %v103
    %v200 = vpop.f32.mrb[0].mxu0
    %v201 = vadd.f32 0.0, %v200
    %v202 = vpop.f32.mrb[0].mxu0
    %203 = vmatprep.mubr.f32.mxu0 %v118
    %204 = vmatmul.mubr.f32.gmra.mrb[0].mxu0 %v105
    %v205 = vpop.f32.mrb[0].mxu0
    %v206 = vadd.f32 0.0, %v205
    %v207 = vpop.f32.mrb[0].mxu0
    %208 = vdwg.mxu0
    %v209 = vld [vmem:[%s4] sm:$0xff]
    %v210 = vld [vmem:[%s4 + $0x8] sm:$0xff]
    %v211 = vld [vmem:[%s4 + $0x10] sm:$0xff]
    %v212 = vld [vmem:[%s4 + $0x18] sm:$0xff]
    %v213 = vld [vmem:[%s4 + $0x20] sm:$0xff]
    %v214 = vld [vmem:[%s4 + $0x28] sm:$0xff]
    %v215 = vld [vmem:[%s4 + $0x30] sm:$0xff]
    %v216 = vld [vmem:[%s4 + $0x38] sm:$0xff]
    %v217 = vld [vmem:[%s4 + $0x40] sm:$0xff]
    %v218 = vld [vmem:[%s4 + $0x48] sm:$0xff]
    %v219 = vld [vmem:[%s4 + $0x50] sm:$0xff]
    %v220 = vld [vmem:[%s4 + $0x58] sm:$0xff]
    %v221 = vld [vmem:[%s4 + $0x60] sm:$0xff]
    %v222 = vld [vmem:[%s4 + $0x68] sm:$0xff]
    %v223 = vld [vmem:[%s4 + $0x70] sm:$0xff]
    %v224 = vld [vmem:[%s4 + $0x78] sm:$0xff]
    %225 = vmatprep.subr.mxu0 0.0
    %226 = vmatpush1.msra.mxu0 %v209
    %227 = vmatprep.subr.mxu0 0.0
    %228 = vmatpush1.msra.mxu0 %v210
    %229 = vmatprep.subr.mxu0 0.0
    %230 = vmatpush1.msra.mxu0 %v211
    %231 = vmatprep.subr.mxu0 0.0
    %232 = vmatpush1.msra.mxu0 %v212
    %233 = vmatprep.subr.mxu0 0.0
    %234 = vmatpush1.msra.mxu0 %v213
    %235 = vmatprep.subr.mxu0 0.0
    %236 = vmatpush1.msra.mxu0 %v214
    %237 = vmatprep.subr.mxu0 0.0
    %238 = vmatpush1.msra.mxu0 %v215
    %239 = vmatprep.subr.mxu0 0.0
    %240 = vmatpush1.msra.mxu0 %v216
    %241 = vmatprep.subr.mxu0 0.0
    %242 = vmatpush1.msra.mxu0 %v217
    %243 = vmatprep.subr.mxu0 0.0
    %244 = vmatpush1.msra.mxu0 %v218
    %245 = vmatprep.subr.mxu0 0.0
    %246 = vmatpush1.msra.mxu0 %v219
    %247 = vmatprep.subr.mxu0 0.0
    %248 = vmatpush1.msra.mxu0 %v220
    %249 = vmatprep.subr.mxu0 0.0
    %250 = vmatpush1.msra.mxu0 %v221
    %251 = vmatprep.subr.mxu0 0.0
    %252 = vmatpush1.msra.mxu0 %v222
    %253 = vmatprep.subr.mxu0 0.0
    %254 = vmatpush1.msra.mxu0 %v223
    %255 = vmatprep.subr.mxu0 0.0
    %256 = vmatpush1.msra.mxu0 %v224
    %257 = vmatprep.subr.mxu0 0.0
    %258 = vmatpush1.msra.mxu0 0.0
    %259 = vmatprep.subr.mxu0 0.0
    %260 = vmatpush1.msra.mxu0 0.0
    %261 = vmatprep.subr.mxu0 0.0
    %262 = vmatpush1.msra.mxu0 0.0
    %263 = vmatprep.subr.mxu0 0.0
    %264 = vmatpush1.msra.mxu0 0.0
    %265 = vmatprep.subr.mxu0 0.0
    %266 = vmatpush1.msra.mxu0 0.0
    %267 = vmatprep.subr.mxu0 0.0
    %268 = vmatpush1.msra.mxu0 0.0
    %269 = vmatprep.subr.mxu0 0.0
    %270 = vmatpush1.msra.mxu0 0.0
    %271 = vmatprep.subr.mxu0 0.0
    %272 = vmatpush1.msra.mxu0 0.0
    %273 = vmatprep.subr.mxu0 0.0
    %274 = vmatpush1.msra.mxu0 0.0
    %275 = vmatprep.subr.mxu0 0.0
    %276 = vmatpush1.msra.mxu0 0.0
    %277 = vmatprep.subr.mxu0 0.0
    %278 = vmatpush1.msra.mxu0 0.0
    %279 = vmatprep.subr.mxu0 0.0
    %280 = vmatpush1.msra.mxu0 0.0
    %281 = vmatprep.subr.mxu0 0.0
    %282 = vmatpush1.msra.mxu0 0.0
    %283 = vmatprep.subr.mxu0 0.0
    %284 = vmatpush1.msra.mxu0 0.0
    %285 = vmatprep.subr.mxu0 0.0
    %286 = vmatpush1.msra.mxu0 0.0
    %287 = vmatprep.subr.mxu0 0.0
    %288 = vmatpush1.msra.mxu0 0.0
    %289 = vmatprep.mubr.f32.mxu0 0.0
    %290 = vmatmul.mubr.f32.gmra.mrb[0].mxu0 %v191
    %v291 = vpop.f32.mrb[0].mxu0
    %v292 = vadd.f32 0.0, %v291
    %v293 = vpop.f32.mrb[0].mxu0
    %294 = vmatprep.mubr.f32.mxu0 0.0
    %295 = vmatmul.mubr.f32.gmra.mrb[0].mxu0 %v196
    %v296 = vpop.f32.mrb[0].mxu0
    %v297 = vadd.f32 0.0, %v296
    %v298 = vpop.f32.mrb[0].mxu0
    %299 = vmatprep.mubr.f32.mxu0 0.0
    %300 = vmatmul.mubr.f32.gmra.mrb[0].mxu0 %v201
    %v301 = vpop.f32.mrb[0].mxu0
    %v302 = vadd.f32 0.0, %v301
    %v303 = vpop.f32.mrb[0].mxu0
    %304 = vmatprep.mubr.f32.mxu0 0.0
    %305 = vmatmul.mubr.f32.gmra.mrb[0].mxu0 %v206
    %v306 = vpop.f32.mrb[0].mxu0
    %v307 = vadd.f32 0.0, %v306
    %v308 = vpop.f32.mrb[0].mxu0
    %309 = vdwg.mxu0
    %v310 = vmul.f32 %v292, 0.0625
    %v311 = vmul.f32 %v297, 0.0625
    %v312 = vmul.f32 %v302, 0.0625
    %v313 = vmul.f32 %v307, 0.0625
    %v314 = vld [vmem:[%s5] sm:$0x3]
    %vm315 = vcmask 261120
    %v317 = vsel %vm315, %v314, 0
    %319 = vmatprep.subr.mxu0 0.0
    %320 = vmatpush1.msra.mxu0 %v310
    %321 = vmatprep.subr.mxu0 0.0
    %322 = vmatpush1.msra.mxu0 %v311
    %323 = vmatprep.subr.mxu0 0.0
    %324 = vmatpush1.msra.mxu0 %v312
    %325 = vmatprep.subr.mxu0 0.0
    %326 = vmatpush1.msra.mxu0 %v313
    %327 = vmatprep.subr.mxu0 0.0
    %328 = vmatpush1.msra.mxu0 0.0
    %329 = vmatprep.subr.mxu0 0.0
    %330 = vmatpush1.msra.mxu0 0.0
    %331 = vmatprep.subr.mxu0 0.0
    %332 = vmatpush1.msra.mxu0 0.0
    %333 = vmatprep.subr.mxu0 0.0
    %334 = vmatpush1.msra.mxu0 0.0
    %335 = vmatprep.subr.mxu0 0.0
    %336 = vmatpush1.msra.mxu0 0.0
    %337 = vmatprep.subr.mxu0 0.0
    %338 = vmatpush1.msra.mxu0 0.0
    %339 = vmatprep.subr.mxu0 0.0
    %340 = vmatpush1.msra.mxu0 0.0
    %341 = vmatprep.subr.mxu0 0.0
    %342 = vmatpush1.msra.mxu0 0.0
    %343 = vmatprep.subr.mxu0 0.0
    %344 = vmatpush1.msra.mxu0 0.0
    %345 = vmatprep.subr.mxu0 0.0
    %346 = vmatpush1.msra.mxu0 0.0
    %347 = vmatprep.subr.mxu0 0.0
    %348 = vmatpush1.msra.mxu0 0.0
    %349 = vmatprep.subr.mxu0 0.0
    %350 = vmatpush1.msra.mxu0 0.0
    %351 = vmatprep.subr.mxu0 0.0
    %352 = vmatpush1.msra.mxu0 0.0
    %353 = vmatprep.subr.mxu0 0.0
    %354 = vmatpush1.msra.mxu0 0.0
    %355 = vmatprep.subr.mxu0 0.0
    %356 = vmatpush1.msra.mxu0 0.0
    %357 = vmatprep.subr.mxu0 0.0
    %358 = vmatpush1.msra.mxu0 0.0
    %359 = vmatprep.subr.mxu0 0.0
    %360 = vmatpush1.msra.mxu0 0.0
    %361 = vmatprep.subr.mxu0 0.0
    %362 = vmatpush1.msra.mxu0 0.0
    %363 = vmatprep.subr.mxu0 0.0
    %364 = vmatpush1.msra.mxu0 0.0
    %365 = vmatprep.subr.mxu0 0.0
    %366 = vmatpush1.msra.mxu0 0.0
    %367 = vmatprep.subr.mxu0 0.0
    %368 = vmatpush1.msra.mxu0 0.0
    %369 = vmatprep.subr.mxu0 0.0
    %370 = vmatpush1.msra.mxu0 0.0
    %371 = vmatprep.subr.mxu0 0.0
    %372 = vmatpush1.msra.mxu0 0.0
    %373 = vmatprep.subr.mxu0 0.0
    %374 = vmatpush1.msra.mxu0 0.0
    %375 = vmatprep.subr.mxu0 0.0
    %376 = vmatpush1.msra.mxu0 0.0
    %377 = vmatprep.subr.mxu0 0.0
    %378 = vmatpush1.msra.mxu0 0.0
    %379 = vmatprep.subr.mxu0 0.0
    %380 = vmatpush1.msra.mxu0 0.0
    %381 = vmatprep.subr.mxu0 0.0
    %382 = vmatpush1.msra.mxu0 0.0
    %383 = vmatprep.mubr.f32.mxu0 0.0
    %384 = vmatmul.mubr.f32.gmra.mrb[0].mxu0 %v317
    %v385 = vpop.f32.mrb[0].mxu0
    %v386 = vadd.f32 0.0, %v385
    %v387 = vpop.f32.mrb[0].mxu0
    %388 = vdwg.mxu0
    %v389 = vmax.f32 %v386, 0.0
    %v390 = vld [vmem:[%s6] sm:$0xff]
    %v391 = vld [vmem:[%s6 + $0x8] sm:$0xff]
    %v392 = vld [vmem:[%s6 + $0x10] sm:$0xff]
    %v393 = vld [vmem:[%s6 + $0x18] sm:$0xff]
    %vm394 = vcmask 15360
    %v396 = vsel %vm394, %v390, 0
    %v399 = vsel %vm394, %v391, 0
    %v402 = vsel %vm394, %v392, 0
    %v405 = vsel %vm394, %v393, 0
    %vm407 = vcmask 1041408
    %v409 = vsel %vm407, %v389, 0
    %411 = vmatprep.subr.mxu0 0.0
    %412 = vmatpush1.msra.mxu0 %v409
    %413 = vmatprep.subr.mxu0 0.0
    %414 = vmatpush1.msra.mxu0 0.0
    %415 = vmatprep.subr.mxu0 0.0
    %416 = vmatpush1.msra.mxu0 0.0
    %417 = vmatprep.subr.mxu0 0.0
    %418 = vmatpush1.msra.mxu0 0.0
    %419 = vmatprep.subr.mxu0 0.0
    %420 = vmatpush1.msra.mxu0 0.0
    %421 = vmatprep.subr.mxu0 0.0
    %422 = vmatpush1.msra.mxu0 0.0
    %423 = vmatprep.subr.mxu0 0.0
    %424 = vmatpush1.msra.mxu0 0.0
    %425 = vmatprep.subr.mxu0 0.0
    %426 = vmatpush1.msra.mxu0 0.0
    %427 = vmatprep.subr.mxu0 0.0
    %428 = vmatpush1.msra.mxu0 0.0
    %429 = vmatprep.subr.mxu0 0.0
    %430 = vmatpush1.msra.mxu0 0.0
    %431 = vmatprep.subr.mxu0 0.0
    %432 = vmatpush1.msra.mxu0 0.0
    %433 = vmatprep.subr.mxu0 0.0
    %434 = vmatpush1.msra.mxu0 0.0
    %435 = vmatprep.subr.mxu0 0.0
    %436 = vmatpush1.msra.mxu0 0.0
    %437 = vmatprep.subr.mxu0 0.0
    %438 = vmatpush1.msra.mxu0 0.0
    %439 = vmatprep.subr.mxu0 0.0
    %440 = vmatpush1.msra.mxu0 0.0
    %441 = vmatprep.subr.mxu0 0.0
    %442 = vmatpush1.msra.mxu0 0.0
    %443 = vmatprep.subr.mxu0 0.0
    %444 = vmatpush1.msra.mxu0 0.0
    %445 = vmatprep.subr.mxu0 0.0
    %446 = vmatpush1.msra.mxu0 0.0
    %447 = vmatprep.subr.mxu0 0.0
    %448 = vmatpush1.msra.mxu0 0.0
    %449 = vmatprep.subr.mxu0 0.0
    %450 = vmatpush1.msra.mxu0 0.0
    %451 = vmatprep.subr.mxu0 0.0
    %452 = vmatpush1.msra.mxu0 0.0
    %453 = vmatprep.subr.mxu0 0.0
    %454 = vmatpush1.msra.mxu0 0.0
    %455 = vmatprep.subr.mxu0 0.0
    %456 = vmatpush1.msra.mxu0 0.0
    %457 = vmatprep.subr.mxu0 0.0
    %458 = vmatpush1.msra.mxu0 0.0
    %459 = vmatprep.subr.mxu0 0.0
    %460 = vmatpush1.msra.mxu0 0.0
    %461 = vmatprep.subr.mxu0 0.0
    %462 = vmatpush1.msra.mxu0 0.0
    %463 = vmatprep.subr.mxu0 0.0
    %464 = vmatpush1.msra.mxu0 0.0
    %465 = vmatprep.subr.mxu0 0.0
    %466 = vmatpush1.msra.mxu0 0.0
    %467 = vmatprep.subr.mxu0 0.0
    %468 = vmatpush1.msra.mxu0 0.0
    %469 = vmatprep.subr.mxu0 0.0
    %470 = vmatpush1.msra.mxu0 0.0
    %471 = vmatprep.subr.mxu0 0.0
    %472 = vmatpush1.msra.mxu0 0.0
    %473 = vmatprep.subr.mxu0 0.0
    %474 = vmatpush1.msra.mxu0 0.0
    %475 = vmatprep.mubr.f32.mxu0 0.0
    %476 = vmatmul.mubr.f32.gmra.mrb[0].mxu0 %v396
    %v477 = vpop.f32.mrb[0].mxu0
    %v478 = vadd.f32 0.0, %v477
    %v479 = vpop.f32.mrb[0].mxu0
    %480 = vmatprep.mubr.f32.mxu0 0.0
    %481 = vmatmul.mubr.f32.gmra.mrb[0].mxu0 %v399
    %v482 = vpop.f32.mrb[0].mxu0
    %v483 = vadd.f32 0.0, %v482
    %v484 = vpop.f32.mrb[0].mxu0
    %485 = vmatprep.mubr.f32.mxu0 0.0
    %486 = vmatmul.mubr.f32.gmra.mrb[0].mxu0 %v402
    %v487 = vpop.f32.mrb[0].mxu0
    %v488 = vadd.f32 0.0, %v487
    %v489 = vpop.f32.mrb[0].mxu0
    %490 = vmatprep.mubr.f32.mxu0 0.0
    %491 = vmatmul.mubr.f32.gmra.mrb[0].mxu0 %v405
    %v492 = vpop.f32.mrb[0].mxu0
    %v493 = vadd.f32 0.0, %v492
    %v494 = vpop.f32.mrb[0].mxu0
    %495 = vdwg.mxu0
    %v496 = vxor.u32 %v478, 2147483648
    %v497 = vxor.u32 %v483, 2147483648
    %v498 = vxor.u32 %v488, 2147483648
    %v499 = vxor.u32 %v493, 2147483648
    %v500 = vmul.f32 %v496, 1.442695
    %v501 = vpow.pop %v500
    %v502 = vmul.f32 %v497, 1.442695
    %v503 = vpow.pop %v502
    %v504 = vmul.f32 %v498, 1.442695
    %v505 = vpow.pop %v504
    %v506 = vmul.f32 %v499, 1.442695
    %v507 = vpow.pop %v506
    %v508 = vadd.f32 %v501, 1.0
    %v509 = vadd.f32 %v503, 1.0
    %v510 = vadd.f32 %v505, 1.0
    %v511 = vadd.f32 %v507, 1.0
    %v512 = vrcp.pop %v508
    %v513 = vmul.f32 1.0, %v512
    %v514 = vrcp.pop %v509
    %v515 = vmul.f32 1.0, %v514
    %v516 = vrcp.pop %v510
    %v517 = vmul.f32 1.0, %v516
    %v518 = vrcp.pop %v511
    %v519 = vmul.f32 1.0, %v518
    %v520 = vld [vmem:[%s3] sm:$0x3]
    %v522 = vsel %vm394, %v513, 0
    %v525 = vsel %vm394, %v515, 0
    %v528 = vsel %vm394, %v517, 0
    %v531 = vsel %vm394, %v519, 0
    %v534 = vsel %vm407, %v520, 0
    %536 = vmatprep.subr.mxu0 0.0
    %537 = vmatpush1.msra.mxu0 %v534
    %538 = vmatprep.subr.mxu0 0.0
    %539 = vmatpush1.msra.mxu0 0.0
    %540 = vmatprep.subr.mxu0 0.0
    %541 = vmatpush1.msra.mxu0 0.0
    %542 = vmatprep.subr.mxu0 0.0
    %543 = vmatpush1.msra.mxu0 0.0
    %544 = vmatprep.subr.mxu0 0.0
    %545 = vmatpush1.msra.mxu0 0.0
    %546 = vmatprep.subr.mxu0 0.0
    %547 = vmatpush1.msra.mxu0 0.0
    %548 = vmatprep.subr.mxu0 0.0
    %549 = vmatpush1.msra.mxu0 0.0
    %550 = vmatprep.subr.mxu0 0.0
    %551 = vmatpush1.msra.mxu0 0.0
    %552 = vmatprep.subr.mxu0 0.0
    %553 = vmatpush1.msra.mxu0 0.0
    %554 = vmatprep.subr.mxu0 0.0
    %555 = vmatpush1.msra.mxu0 0.0
    %556 = vmatprep.subr.mxu0 0.0
    %557 = vmatpush1.msra.mxu0 0.0
    %558 = vmatprep.subr.mxu0 0.0
    %559 = vmatpush1.msra.mxu0 0.0
    %560 = vmatprep.subr.mxu0 0.0
    %561 = vmatpush1.msra.mxu0 0.0
    %562 = vmatprep.subr.mxu0 0.0
    %563 = vmatpush1.msra.mxu0 0.0
    %564 = vmatprep.subr.mxu0 0.0
    %565 = vmatpush1.msra.mxu0 0.0
    %566 = vmatprep.subr.mxu0 0.0
    %567 = vmatpush1.msra.mxu0 0.0
    %568 = vmatprep.subr.mxu0 0.0
    %569 = vmatpush1.msra.mxu0 0.0
    %570 = vmatprep.subr.mxu0 0.0
    %571 = vmatpush1.msra.mxu0 0.0
    %572 = vmatprep.subr.mxu0 0.0
    %573 = vmatpush1.msra.mxu0 0.0
    %574 = vmatprep.subr.mxu0 0.0
    %575 = vmatpush1.msra.mxu0 0.0
    %576 = vmatprep.subr.mxu0 0.0
    %577 = vmatpush1.msra.mxu0 0.0
    %578 = vmatprep.subr.mxu0 0.0
    %579 = vmatpush1.msra.mxu0 0.0
    %580 = vmatprep.subr.mxu0 0.0
    %581 = vmatpush1.msra.mxu0 0.0
    %582 = vmatprep.subr.mxu0 0.0
    %583 = vmatpush1.msra.mxu0 0.0
    %584 = vmatprep.subr.mxu0 0.0
    %585 = vmatpush1.msra.mxu0 0.0
    %586 = vmatprep.subr.mxu0 0.0
    %587 = vmatpush1.msra.mxu0 0.0
    %588 = vmatprep.subr.mxu0 0.0
    %589 = vmatpush1.msra.mxu0 0.0
    %590 = vmatprep.subr.mxu0 0.0
    %591 = vmatpush1.msra.mxu0 0.0
    %592 = vmatprep.subr.mxu0 0.0
    %593 = vmatpush1.msra.mxu0 0.0
    %594 = vmatprep.subr.mxu0 0.0
    %595 = vmatpush1.msra.mxu0 0.0
    %596 = vmatprep.subr.mxu0 0.0
    %597 = vmatpush1.msra.mxu0 0.0
    %598 = vmatprep.subr.mxu0 0.0
    %599 = vmatpush1.msra.mxu0 0.0
    %600 = vmatprep.mubr.f32.mxu0 0.0
    %601 = vmatmul.mubr.f32.gmra.mrb[0].mxu0 %v522
    %v602 = vpop.f32.mrb[0].mxu0
    %v603 = vadd.f32 0.0, %v602
    %v604 = vpop.f32.mrb[0].mxu0
    %605 = vmatprep.mubr.f32.mxu0 0.0
    %606 = vmatmul.mubr.f32.gmra.mrb[0].mxu0 %v525
    %v607 = vpop.f32.mrb[0].mxu0
    %v608 = vadd.f32 0.0, %v607
    %v609 = vpop.f32.mrb[0].mxu0
    %610 = vmatprep.mubr.f32.mxu0 0.0
    %611 = vmatmul.mubr.f32.gmra.mrb[0].mxu0 %v528
    %v612 = vpop.f32.mrb[0].mxu0
    %v613 = vadd.f32 0.0, %v612
    %v614 = vpop.f32.mrb[0].mxu0
    %615 = vmatprep.mubr.f32.mxu0 0.0
    %616 = vmatmul.mubr.f32.gmra.mrb[0].mxu0 %v531
    %v617 = vpop.f32.mrb[0].mxu0
    %v618 = vadd.f32 0.0, %v617
    %v619 = vpop.f32.mrb[0].mxu0
    %620 = vdwg.mxu0
    %v621 = vmul.f32 %v191, %v603
    %v622 = vmul.f32 %v196, %v608
    %v623 = vmul.f32 %v201, %v613
    %v624 = vmul.f32 %v206, %v618
    %625 = vst [vmem:[#allocation2] sm:$0xff] %v621
    %626 = vst [vmem:[#allocation2 + $0x8] sm:$0xff] %v622
    %627 = vst [vmem:[#allocation2 + $0x10] sm:$0xff] %v623
    %628 = vst [vmem:[#allocation2 + $0x18] sm:$0xff] %v624
    // Predicated region
    $region30: #{tpu_custom_call.1} parent=1 // pred_check
      _
    $region31: #{tpu_custom_call.1} parent=1 // pred_check_branch
      %630 = sbr.rel (0) target = $region33
    $region32: #{tpu_custom_call.1} parent=1 // pred_region
      %s632 = ssub.s32 512, 512
      %633 = vsyncadd [#allocation3], %s632
      %s634 = sshll.u32 [#allocation2], 4
      %s635 = int_to_ptr.vmem [resolvable:$true] %s634
      %640 = dma.vmem_to_hbm [thread:$0]  %s635, 512, %s7, [#allocation3], 128, 128, 8
    $region33: #{tpu_custom_call.1} parent=1 // pred_fallthru
      _
    // Predicated region
    $region34: #{tpu_custom_call.1} parent=1 // pred_check
      _
    $region35: #{tpu_custom_call.1} parent=1 // pred_check_branch
      %642 = sbr.rel (0) target = $region37
    $region36: #{tpu_custom_call.1} parent=1 // pred_region
      %643 = dma.done [#allocation3], 512
    $region37: #{tpu_custom_call.1} parent=1 // pred_fallthru
      _
    %644 = vsyncpa [#allocation3], 1

</llo_original>
